<compile_context>
chip_gen: v7x
topology: tpu7x:2x2x1
jax: 0.10.0
libtpu: 0.0.40
codegen_flags: <defaults>
</compile_context>

<pallas_src>
import jax
import jax.numpy as jnp
from jax.experimental import pallas as pl
from jax.experimental.pallas import tpu as pltpu

_LANES = 128
_TARGET_TILE_BYTES = 1 << 20   # ~1 MiB per-operand tile (~86% of HBM roofline on v6e)
_TINY_FALLBACK_ROWS = 64       # below ~32 KiB (f32): XLA's fused elementwise is faster


def _mse_none_kernel(pred_ref, data_ref, out_ref):
    # elementwise squared error on the current VMEM tile (pure VPU work)
    diff = pred_ref[...] - data_ref[...]
    out_ref[...] = diff * diff


def _pallas_mse_2d(pred2, data2):
    """Squared error on a lane-dense (rows, 128) slab via pallas_call.

    The final grid block may be partial; Pallas pads its reads and masks its
    writes, so no wrapper-side padding is ever needed here.
    """
    rows, _ = pred2.shape
    itemsize = jnp.dtype(pred2.dtype).itemsize
    # native sublane multiple per dtype: f32 -> 8 rows, bf16 -> 16, int8/fp8 -> 32
    min_rows = max(8, 32 // itemsize)
    # ~1 MiB tiles regardless of dtype; 3 operands x 2 pipeline buffers = ~6 MiB VMEM
    # (inside v5e's 16 MiB scoped default, trivially inside v6e/v7x's 32 MiB).
    max_block_rows = max(min_rows, _TARGET_TILE_BYTES // (_LANES * itemsize))

    if rows <= max_block_rows:
        block_rows = rows            # single block == full array dims (always legal)
    else:
        block_rows = max_block_rows  # multiple of min_rows; last block may be partial
    grid_steps = pl.cdiv(rows, block_rows)

    spec = pl.BlockSpec((block_rows, _LANES), lambda i: (i, 0))
    total = rows * _LANES
    cost = pl.CostEstimate(
        flops=2 * total,
        transcendentals=0,
        bytes_accessed=3 * total * itemsize,
    )

    # NOTE: input_output_aliases={0: 0} would save the output allocation when `pred`
    # is donated under jit; omitted so eager-mode callers keep their input buffers.
    return pl.pallas_call(
        _mse_none_kernel,
        out_shape=jax.ShapeDtypeStruct((rows, _LANES), pred2.dtype),
        grid=(grid_steps,),
        in_specs=[spec, spec],
        out_specs=spec,
        compiler_params=pltpu.CompilerParams(
            # Output block index differs every step (no accumulator), so "parallel"
            # is correct; on v7x this shards the row-grid across both TensorCores.
            dimension_semantics=("parallel",),
        ),
        cost_estimate=cost,
    )(pred2, data2)


def mse_loss_none(pred, data, *, use_pallas=None):
    """nn.MSELoss(reduction='none'): elementwise (pred - data)**2.

    Intended to be called under jax.jit (the reshapes/static slices then become
    free layout metadata and only the pallas_call touches HBM).
    """
    assert pred.shape == data.shape and pred.dtype == data.dtype
    assert jnp.issubdtype(pred.dtype, jnp.floating), "MSELoss expects floating dtypes"
    orig_shape = pred.shape
    total = pred.size
    rows_needed = pl.cdiv(total, _LANES)

    if use_pallas is None:
        use_pallas = rows_needed >= _TINY_FALLBACK_ROWS
    aligned = (total // _LANES) * _LANES
    if (not use_pallas) or aligned == 0:
        # Tiny tensors: a custom-call boundary (plus launch cost) loses to XLA's
        # native elementwise fusion.
        return (pred - data) ** 2

    flat_p = pred.reshape(-1)
    flat_d = data.reshape(-1)

    # Lane-aligned main slab through the kernel — no jnp.pad, no output slicing.
    main = _pallas_mse_2d(
        flat_p[:aligned].reshape(-1, _LANES),
        flat_d[:aligned].reshape(-1, _LANES),
    ).reshape(-1)

    if aligned == total:
        return main.reshape(orig_shape)

    # Rare <128-element lane tail: tiny plain-JAX epilogue instead of padding the slab.
    tail = (flat_p[aligned:] - flat_d[aligned:]) ** 2
    return jnp.concatenate([main, tail]).reshape(orig_shape)


# TODO(synk): gradient_penalty() operates on model.named_parameters() gradients
# (data-dependent Python control flow over a parameter list); it is not part of
# forward() and is not translated to a Pallas kernel here.


if __name__ == "__main__":
    loss_fn = jax.jit(mse_loss_none, static_argnames=("use_pallas",))

    key = jax.random.PRNGKey(0)
    k1, k2 = jax.random.split(key)
    # NCHW, small shapes consistent with a typical prediction/target pair
    pred = jax.random.normal(k1, (2, 4, 16, 16), dtype=jnp.float32)
    data = jax.random.normal(k2, (2, 4, 16, 16), dtype=jnp.float32)
    ref = (pred - data) ** 2

    # 1) Exercise the Pallas kernel path explicitly on the small shape.
    out = loss_fn(pred, data, use_pallas=True)
    jax.block_until_ready(out)
    assert out.shape == pred.shape and out.dtype == pred.dtype
    assert jnp.allclose(out, ref, atol=1e-6, rtol=1e-6)

    # 2) Default (auto) path — tiny input takes the fused plain-JAX fallback.
    out_auto = loss_fn(pred, data)
    jax.block_until_ready(out_auto)
    assert jnp.allclose(out_auto, ref, atol=1e-6, rtol=1e-6)

    # 3) Multi-step grid with a partial last block (4123 rows, 2048-row blocks).
    kp, kd = jax.random.split(jax.random.PRNGKey(1))
    big_p = jax.random.normal(kp, (4123, 128), dtype=jnp.float32)
    big_d = jax.random.normal(kd, (4123, 128), dtype=jnp.float32)
    out_big = loss_fn(big_p, big_d, use_pallas=True)
    jax.block_until_ready(out_big)
    assert jnp.allclose(out_big, (big_p - big_d) ** 2, atol=1e-6, rtol=1e-6)

    # 4) Unaligned total (<128-element lane tail via the plain-JAX epilogue).
    ku1, ku2 = jax.random.split(jax.random.PRNGKey(2))
    up = jax.random.normal(ku1, (3, 5, 7, 11), dtype=jnp.float32)
    ud = jax.random.normal(ku2, (3, 5, 7, 11), dtype=jnp.float32)
    out_u = loss_fn(up, ud, use_pallas=True)
    jax.block_until_ready(out_u)
    assert jnp.allclose(out_u, (up - ud) ** 2, atol=1e-6, rtol=1e-6)

    print("KERNEL_OK")
</pallas_src>

<mosaic_0001>
module attributes {stable_mosaic.version = 11 : i64} {
  func.func @_mse_none_kernel(%arg0: i32, %arg1: memref<16x128xf32, #tpu.memory_space<vmem>>, %arg2: memref<16x128xf32, #tpu.memory_space<vmem>>, %arg3: memref<16x128xf32, #tpu.memory_space<vmem>>) attributes {dimension_semantics = [#tpu.dimension_semantics<parallel>], iteration_bounds = array<i64: 1>, scalar_prefetch = 0 : i64, scratch_operands = 0 : i64, tpu.core_type = #tpu.core_type<tc>, window_params = [{transform_indices = @transform_0, window_bounds = array<i64: 16, 128>}, {transform_indices = @transform_1, window_bounds = array<i64: 16, 128>}, {transform_indices = @transform_2, window_bounds = array<i64: 16, 128>}]} {
    %c0 = arith.constant 0 : index
    %c0_0 = arith.constant 0 : index
    %0 = vector.load %arg1[%c0, %c0_0] : memref<16x128xf32, #tpu.memory_space<vmem>>, vector<16x128xf32>
    %c0_1 = arith.constant 0 : index
    %c0_2 = arith.constant 0 : index
    %1 = vector.load %arg2[%c0_1, %c0_2] : memref<16x128xf32, #tpu.memory_space<vmem>>, vector<16x128xf32>
    %2 = arith.subf %0, %1 : vector<16x128xf32>
    %3 = arith.mulf %2, %2 : vector<16x128xf32>
    %c0_3 = arith.constant 0 : index
    %c0_4 = arith.constant 0 : index
    %4 = vector.load %arg3[%c0_3, %c0_4] : memref<16x128xf32, #tpu.memory_space<vmem>>, vector<16x128xf32>
    tpu.vector_store %arg3[%c0_3, %c0_4], %3 {strides = array<i32>} : memref<16x128xf32, #tpu.memory_space<vmem>>, vector<16x128xf32>,
    return
  }
  func.func @transform_0(%arg0: i32) -> (i32, i32) {
    %c0_i32 = arith.constant 0 : i32
    %c0_i32_0 = arith.constant 0 : i32
    return %arg0, %c0_i32 : i32, i32
  }
  func.func @transform_1(%arg0: i32) -> (i32, i32) {
    %c0_i32 = arith.constant 0 : i32
    %c0_i32_0 = arith.constant 0 : i32
    return %arg0, %c0_i32 : i32, i32
  }
  func.func @transform_2(%arg0: i32) -> (i32, i32) {
    %c0_i32 = arith.constant 0 : i32
    %c0_i32_0 = arith.constant 0 : i32
    return %arg0, %c0_i32 : i32, i32
  }
}

</mosaic_0001>

<llo_original>
// kernel: mse_loss_none.1
$region0: #{mse_loss_none.1}
  #allocation0 [shape = 'u32[]', space=smem, size = 0x4, offset = 0x4, fixed_abs, tag = 'smem constant byte address 0x4 - core index']
  #allocation1 [shape = 'u32[144,128]{1,0:T(1,128)}', space=vmem, size = 0x12000, scoped, tag = 'internal scratch']
  %s0 = inlined_call_operand.vmem [shape: f32[16,128], index: 0, kind: input, shape index: {}]
  %s1 = inlined_call_operand.vmem [shape: f32[16,128], index: 1, kind: input, shape index: {}]
  %s2 = inlined_call_operand.vmem [shape: f32[16,128], index: 2, kind: output, shape index: {}]
  %s3 = sld [smem:[#allocation0]]
  $region18: #{mse_loss_none.1} parent=0
    _
  %s5 = ssub.s32 1, %s3
  %s6 = scalar_select 0, %s5, %s3
  // Predicated region
  $region2: #{mse_loss_none.1} parent=0 // pred_check
    _
  $region3: #{mse_loss_none.1} parent=0 // pred_check_branch
    %8 = sbr.rel (0) target = $region5
  $region4: #{mse_loss_none.1} parent=0 // pred_region
    _
  $region5: #{mse_loss_none.1} parent=0 // pred_fallthru
    _
  // Predicated region
  $region6: #{mse_loss_none.1} parent=0 // pred_check
    _
  $region7: #{mse_loss_none.1} parent=0 // pred_check_branch
    %10 = sbr.rel (0) target = $region9
  $region8: #{mse_loss_none.1} parent=0 // pred_region
    _
  $region9: #{mse_loss_none.1} parent=0 // pred_fallthru
    _
  %v11 = vld [vmem:[%s0] sm:$0xff]
  %v12 = vld [vmem:[%s0 + $0x8] sm:$0xff]
  %v13 = vld [vmem:[%s1] sm:$0xff]
  %v14 = vld [vmem:[%s1 + $0x8] sm:$0xff]
  %v15 = vsub.f32 %v11, %v13
  %v16 = vsub.f32 %v12, %v14
  %v17 = vmul.f32 %v15, %v15
  %v18 = vmul.f32 %v16, %v16
  %19 = vst [vmem:[%s2] sm:$0xff] %v17
  %20 = vst [vmem:[%s2 + $0x8] sm:$0xff] %v18
  // Predicated region
  $region10: #{mse_loss_none.1} parent=0 // pred_check
    _
  $region11: #{mse_loss_none.1} parent=0 // pred_check_branch
    %22 = sbr.rel (0) target = $region13
  $region12: #{mse_loss_none.1} parent=0 // pred_region
    _
  $region13: #{mse_loss_none.1} parent=0 // pred_fallthru
    _
  // Predicated region
  $region14: #{mse_loss_none.1} parent=0 // pred_check
    _
  $region15: #{mse_loss_none.1} parent=0 // pred_check_branch
    %24 = sbr.rel (0) target = $region17
  $region16: #{mse_loss_none.1} parent=0 // pred_region
    _
  $region17: #{mse_loss_none.1} parent=0 // pred_fallthru
    _

</llo_original>
